<compile_context>
chip_gen: v6e
topology: v6e:2x2x1
jax: 0.10.0
libtpu: 0.0.40
codegen_flags: <defaults>
</compile_context>

<pallas_src>
import functools

import jax
import jax.numpy as jnp
from jax.experimental import pallas as pl
from jax.experimental.pallas import tpu as pltpu


def vae_nb_kernel(
    x_ref, sf_ref,
    w_e_ref, b_e_ref,            # encoder Linear with BN folded in
    w_mulv_ref, b_mulv_ref,      # fused [H1, 2Z] mu||logvar head
    w_dfold_ref, b_dfold_ref,    # (w_mu @ w_d) with decoder BN folded in
    w_sr_ref, b_sr_ref,          # fused [H2, 2*D_in] scale||r head
    *out_refs, d_in, with_hidden,
):
    if with_hidden:
        mulv_ref, norm_ref, disp_ref, scalex_ref, hidden_ref = out_refs
    else:
        mulv_ref, norm_ref, disp_ref, scalex_ref = out_refs

    # ---- Encoder hidden layer: Linear (BN folded) -> ReLU ----
    x = x_ref[...].astype(jnp.bfloat16)
    h = jnp.dot(x, w_e_ref[...], preferred_element_type=jnp.float32) + b_e_ref[...]
    h = jnp.maximum(h, 0.0)
    if with_hidden:
        hidden_ref[...] = h

    h_bf = h.astype(jnp.bfloat16)

    # ---- Fused mean||logvar head (single lane-dense [TN, 2Z] matmul + store) ----
    mulv = jnp.dot(h_bf, w_mulv_ref[...], preferred_element_type=jnp.float32) + b_mulv_ref[...]
    mulv_ref[...] = mulv

    # ---- Decoder hidden directly from h: Linear(w_mu@w_d, BN folded) -> ReLU ----
    # (eval-mode latent_1 == mean_1, so the K=Z matmul is folded away)
    d = jnp.dot(h_bf, w_dfold_ref[...], preferred_element_type=jnp.float32) + b_dfold_ref[...]
    d = jnp.maximum(d, 0.0).astype(jnp.bfloat16)

    # ---- Fused NB heads: one [H2, 2*D_in] matmul, then split lanes ----
    sr = jnp.dot(d, w_sr_ref[...], preferred_element_type=jnp.float32) + b_sr_ref[...]
    logits = sr[:, :d_in]
    log_r = sr[:, d_in:]

    # softmax(dim=-1), numerically stable, all in f32
    m = jnp.max(logits, axis=-1, keepdims=True)
    e = jnp.exp(logits - m)
    norm = e * pl.reciprocal(jnp.sum(e, axis=-1, keepdims=True), approx=False)
    norm_ref[...] = norm

    # scale_x = exp(scale_factor) * norm_x   (broadcast (TN,1) * (TN,D_in))
    scalex_ref[...] = jnp.exp(sf_ref[...]) * norm

    # disper_x = exp(Linear_r(d))
    disp_ref[...] = jnp.exp(log_r)


def prepare_params(params):
    """Fold BatchNorm1d(eval) into the Linear layers, fuse heads, cast weights to bf16.

    Done once per call in plain JAX (static parameter plumbing, not kernel work)."""
    f32 = jnp.float32

    # Encoder Linear + BN fold:  y = (x@w + b)*s + t  ==  x@(w*s) + (b*s + t)
    w_e = (params["w_e"] * params["bn_e_scale"]).astype(jnp.bfloat16)
    b_e = (params["b_e"] * params["bn_e_scale"] + params["bn_e_shift"]).astype(f32)

    # Fused mu || logvar head
    w_mulv = jnp.concatenate([params["w_mu"], params["w_lv"]], axis=1).astype(jnp.bfloat16)
    b_mulv = jnp.concatenate([params["b_mu"], params["b_lv"]], axis=1).astype(f32)

    # Decoder hidden folded through the mean head + decoder BN fold:
    #   d_pre = (h@w_mu + b_mu)@w_d + b_d  ==  h@(w_mu@w_d) + (b_mu@w_d + b_d)
    w_fold = jnp.dot(params["w_mu"], params["w_d"], preferred_element_type=f32)
    b_fold = jnp.dot(params["b_mu"], params["w_d"], preferred_element_type=f32) + params["b_d"]
    w_dfold = (w_fold * params["bn_d_scale"]).astype(jnp.bfloat16)
    b_dfold = (b_fold * params["bn_d_scale"] + params["bn_d_shift"]).astype(f32)

    # Fused scale || r head
    w_sr = jnp.concatenate([params["w_scale"], params["w_r"]], axis=1).astype(jnp.bfloat16)
    b_sr = jnp.concatenate([params["b_scale"], params["b_r"]], axis=1).astype(f32)

    return (w_e, b_e, w_mulv, b_mulv, w_dfold, b_dfold, w_sr, b_sr)


def _pick_batch_tile(n):
    # Small problems: single block (full array dims always legal).
    # Large problems: 256-row tiles (multiple of 8/16) for pipelined HBM traffic
    # while keeping tile + weight footprint well under v7x's 64 MiB VMEM.
    return n if n <= 256 else 256


def vae_forward(x, scale_factor, params, return_hidden=True):
    """Fused VAE(Type='NB') eval-mode forward as one batch-gridded Pallas call."""
    N, D_in = x.shape
    H1 = params["w_e"].shape[1]
    Z = params["w_mu"].shape[1]
    H2 = params["w_d"].shape[1]

    (w_e, b_e, w_mulv, b_mulv, w_dfold, b_dfold, w_sr, b_sr) = prepare_params(params)

    x = x.astype(jnp.float32)
    scale_factor = scale_factor.astype(jnp.float32)

    TN = _pick_batch_tile(N)
    grid = (pl.cdiv(N, TN),)

    def act_spec(feat):
        return pl.BlockSpec((TN, feat), lambda i: (i, 0))

    def resident(arr):
        return pl.BlockSpec(arr.shape, lambda i: (0, 0))

    inputs = (x, scale_factor, w_e, b_e, w_mulv, b_mulv, w_dfold, b_dfold, w_sr, b_sr)

    in_specs = [
        act_spec(D_in),        # x
        act_spec(1),           # scale_factor
        resident(w_e), resident(b_e),
        resident(w_mulv), resident(b_mulv),
        resident(w_dfold), resident(b_dfold),
        resident(w_sr), resident(b_sr),
    ]

    out_shapes = [
        jax.ShapeDtypeStruct((N, 2 * Z), jnp.float32),   # mean_1 || logvar_1 (lane-dense)
        jax.ShapeDtypeStruct((N, D_in), jnp.float32),    # norm_x
        jax.ShapeDtypeStruct((N, D_in), jnp.float32),    # disper_x
        jax.ShapeDtypeStruct((N, D_in), jnp.float32),    # scale_x (recon_x)
    ]
    out_specs = [act_spec(2 * Z), act_spec(D_in), act_spec(D_in), act_spec(D_in)]
    if return_hidden:
        out_shapes.append(jax.ShapeDtypeStruct((N, H1), jnp.float32))
        out_specs.append(act_spec(H1))

    flops = 2 * N * (D_in * H1 + H1 * 2 * Z + H1 * H2 + H2 * 2 * D_in)
    transcendentals = N * (2 * D_in + 1)
    bytes_accessed = sum(a.size * a.dtype.itemsize for a in inputs) + sum(
        s.size * s.dtype.itemsize for s in out_shapes
    )

    kernel = functools.partial(vae_nb_kernel, d_in=D_in, with_hidden=return_hidden)

    outs = pl.pallas_call(
        kernel,
        grid=grid,
        out_shape=tuple(out_shapes),
        in_specs=in_specs,
        out_specs=tuple(out_specs),
        compiler_params=pltpu.CompilerParams(dimension_semantics=("parallel",)),
        cost_estimate=pl.CostEstimate(
            flops=flops, transcendentals=transcendentals, bytes_accessed=bytes_accessed
        ),
    )(*inputs)

    if return_hidden:
        mulv, norm_x, disp_x, scale_x, hidden = outs
    else:
        mulv, norm_x, disp_x, scale_x = outs
        hidden = None

    mean_1 = mulv[:, :Z]
    logvar_1 = mulv[:, Z:]

    # latent_z1 = mean_1 in eval mode
    return dict(
        norm_x=norm_x,
        disper_x=disp_x,
        dropout_rate=None,
        recon_x=scale_x,
        latent_z1=mean_1,
        latent_z2=None,
        mean_1=mean_1,
        logvar_1=logvar_1,
        mean_2=None,
        logvar_2=None,
        hidden=hidden,
    )


def init_params(key, D_in, H1, Z, H2):
    """Deterministic synthetic parameter init matching the module's shapes.

    layer_e = [D_in, H1], hidden1 = H1, Zdim = Z, layer_d = [Z, H2], hidden2 = H2."""
    ks = jax.random.split(key, 8)

    def lin(k, fan_in, fan_out):
        w = jax.random.normal(k, (fan_in, fan_out), jnp.float32) * (1.0 / jnp.sqrt(fan_in))
        b = jnp.zeros((1, fan_out), jnp.float32)
        return w, b

    w_e, b_e = lin(ks[0], D_in, H1)
    w_mu, b_mu = lin(ks[1], H1, Z)
    w_lv, b_lv = lin(ks[2], H1, Z)
    w_d, b_d = lin(ks[3], Z, H2)
    w_scale, b_scale = lin(ks[4], H2, D_in)
    w_r, b_r = lin(ks[5], H2, D_in)

    # BatchNorm1d(eps=0.001): fresh stats -> running_mean=0, running_var=1, gamma=1, beta=0
    eps = 1e-3
    bn_e_scale = jnp.full((1, H1), 1.0 / jnp.sqrt(1.0 + eps), jnp.float32)
    bn_e_shift = jnp.zeros((1, H1), jnp.float32)
    bn_d_scale = jnp.full((1, H2), 1.0 / jnp.sqrt(1.0 + eps), jnp.float32)
    bn_d_shift = jnp.zeros((1, H2), jnp.float32)

    return dict(
        w_e=w_e, b_e=b_e, bn_e_scale=bn_e_scale, bn_e_shift=bn_e_shift,
        w_mu=w_mu, b_mu=b_mu, w_lv=w_lv, b_lv=b_lv,
        w_d=w_d, b_d=b_d, bn_d_scale=bn_d_scale, bn_d_shift=bn_d_shift,
        w_scale=w_scale, b_scale=b_scale, w_r=w_r, b_r=b_r,
    )


if __name__ == "__main__":
    # Small shapes consistent with the module:
    #   layer_e=[32, 64], hidden1=64, Zdim=16, layer_d=[16, 64], hidden2=64, Type='NB'
    N, D_in, H1, Z, H2 = 8, 32, 64, 16, 64

    key = jax.random.PRNGKey(0)
    k_x, k_sf, k_p = jax.random.split(key, 3)

    X = jax.random.normal(k_x, (N, D_in), jnp.float32)
    scale_factor = jax.random.uniform(k_sf, (N, 1), jnp.float32, minval=0.5, maxval=1.5)
    params = init_params(k_p, D_in, H1, Z, H2)

    fwd = jax.jit(lambda x, sf: vae_forward(x, sf, params, return_hidden=True))
    out = fwd(X, scale_factor)
    jax.block_until_ready(out)

    # light sanity checks on semantics
    row_sums = jnp.sum(out["norm_x"], axis=-1)
    assert jnp.allclose(row_sums, 1.0, atol=1e-5), "softmax rows must sum to 1"
    assert bool(jnp.all(out["disper_x"] > 0.0)), "dispersion must be positive (exp)"
    assert out["recon_x"].shape == (N, D_in)
    assert out["norm_x"].shape == (N, D_in)
    assert out["mean_1"].shape == (N, Z) and out["logvar_1"].shape == (N, Z)
    assert out["latent_z1"].shape == (N, Z)
    assert out["hidden"].shape == (N, H1)

    print("KERNEL_OK")
</pallas_src>

<mosaic_0001>
module attributes {stable_mosaic.version = 11 : i64} {
  func.func @vae_nb_kernel(%arg0: i32, %arg1: memref<8x32xf32, #tpu.memory_space<vmem>>, %arg2: memref<8x1xf32, #tpu.memory_space<vmem>>, %arg3: memref<32x64xbf16, #tpu.memory_space<vmem>>, %arg4: memref<1x64xf32, #tpu.memory_space<vmem>>, %arg5: memref<64x32xbf16, #tpu.memory_space<vmem>>, %arg6: memref<1x32xf32, #tpu.memory_space<vmem>>, %arg7: memref<64x64xbf16, #tpu.memory_space<vmem>>, %arg8: memref<1x64xf32, #tpu.memory_space<vmem>>, %arg9: memref<64x64xbf16, #tpu.memory_space<vmem>>, %arg10: memref<1x64xf32, #tpu.memory_space<vmem>>, %arg11: memref<8x32xf32, #tpu.memory_space<vmem>>, %arg12: memref<8x32xf32, #tpu.memory_space<vmem>>, %arg13: memref<8x32xf32, #tpu.memory_space<vmem>>, %arg14: memref<8x32xf32, #tpu.memory_space<vmem>>, %arg15: memref<8x64xf32, #tpu.memory_space<vmem>>) attributes {dimension_semantics = [#tpu.dimension_semantics<parallel>], iteration_bounds = array<i64: 1>, scalar_prefetch = 0 : i64, scratch_operands = 0 : i64, tpu.core_type = #tpu.core_type<tc>, window_params = [{transform_indices = @transform_0, window_bounds = array<i64: 8, 32>}, {transform_indices = @transform_1, window_bounds = array<i64: 8, 1>}, {pipeline_mode = #tpu.pipeline_mode<synchronous>, transform_indices = @transform_2, window_bounds = array<i64: 32, 64>}, {pipeline_mode = #tpu.pipeline_mode<synchronous>, transform_indices = @transform_3, window_bounds = array<i64: 1, 64>}, {pipeline_mode = #tpu.pipeline_mode<synchronous>, transform_indices = @transform_4, window_bounds = array<i64: 64, 32>}, {pipeline_mode = #tpu.pipeline_mode<synchronous>, transform_indices = @transform_5, window_bounds = array<i64: 1, 32>}, {pipeline_mode = #tpu.pipeline_mode<synchronous>, transform_indices = @transform_6, window_bounds = array<i64: 64, 64>}, {pipeline_mode = #tpu.pipeline_mode<synchronous>, transform_indices = @transform_7, window_bounds = array<i64: 1, 64>}, {pipeline_mode = #tpu.pipeline_mode<synchronous>, transform_indices = @transform_8, window_bounds = array<i64: 64, 64>}, {pipeline_mode = #tpu.pipeline_mode<synchronous>, transform_indices = @transform_9, window_bounds = array<i64: 1, 64>}, {transform_indices = @transform_10, window_bounds = array<i64: 8, 32>}, {transform_indices = @transform_11, window_bounds = array<i64: 8, 32>}, {transform_indices = @transform_12, window_bounds = array<i64: 8, 32>}, {transform_indices = @transform_13, window_bounds = array<i64: 8, 32>}, {transform_indices = @transform_14, window_bounds = array<i64: 8, 64>}]} {
    %c0 = arith.constant 0 : index
    %c0_0 = arith.constant 0 : index
    %0 = vector.load %arg1[%c0, %c0_0] : memref<8x32xf32, #tpu.memory_space<vmem>>, vector<8x32xf32>
    %1 = arith.truncf %0 : vector<8x32xf32> to vector<8x32xbf16>
    %c0_1 = arith.constant 0 : index
    %c0_2 = arith.constant 0 : index
    %2 = vector.load %arg3[%c0_1, %c0_2] : memref<32x64xbf16, #tpu.memory_space<vmem>>, vector<32x64xbf16>
    %cst = arith.constant dense<0.000000e+00> : vector<8x64xf32>
    %3 = tpu.matmul %1, %2, %cst {dimension_numbers = #tpu.dot_dimension_numbers<[1], [0], [0], [1], [0, 0, 1, 1], [], []>} : vector<8x32xbf16>, vector<32x64xbf16>, vector<8x64xf32> -> vector<8x64xf32>
    %c0_3 = arith.constant 0 : index
    %c0_4 = arith.constant 0 : index
    %4 = vector.load %arg4[%c0_3, %c0_4] : memref<1x64xf32, #tpu.memory_space<vmem>>, vector<1x64xf32>
    %5 = vector.broadcast %4 : vector<1x64xf32> to vector<8x64xf32>
    %6 = arith.addf %3, %5 : vector<8x64xf32>
    %cst_5 = arith.constant 0.000000e+00 : f32
    %7 = vector.broadcast %cst_5 : f32 to vector<8x64xf32>
    %8 = arith.maximumf %6, %7 : vector<8x64xf32>
    %c0_6 = arith.constant 0 : index
    %c0_7 = arith.constant 0 : index
    %9 = vector.load %arg15[%c0_6, %c0_7] : memref<8x64xf32, #tpu.memory_space<vmem>>, vector<8x64xf32>
    tpu.vector_store %arg15[%c0_6, %c0_7], %8 {strides = array<i32>} : memref<8x64xf32, #tpu.memory_space<vmem>>, vector<8x64xf32>,
    %10 = arith.truncf %8 : vector<8x64xf32> to vector<8x64xbf16>
    %c0_8 = arith.constant 0 : index
    %c0_9 = arith.constant 0 : index
    %11 = vector.load %arg5[%c0_8, %c0_9] : memref<64x32xbf16, #tpu.memory_space<vmem>>, vector<64x32xbf16>
    %cst_10 = arith.constant dense<0.000000e+00> : vector<8x32xf32>
    %12 = tpu.matmul %10, %11, %cst_10 {dimension_numbers = #tpu.dot_dimension_numbers<[1], [0], [0], [1], [0, 0, 1, 1], [], []>} : vector<8x64xbf16>, vector<64x32xbf16>, vector<8x32xf32> -> vector<8x32xf32>
    %c0_11 = arith.constant 0 : index
    %c0_12 = arith.constant 0 : index
    %13 = vector.load %arg6[%c0_11, %c0_12] : memref<1x32xf32, #tpu.memory_space<vmem>>, vector<1x32xf32>
    %14 = vector.broadcast %13 : vector<1x32xf32> to vector<8x32xf32>
    %15 = arith.addf %12, %14 : vector<8x32xf32>
    %c0_13 = arith.constant 0 : index
    %c0_14 = arith.constant 0 : index
    %16 = vector.load %arg11[%c0_13, %c0_14] : memref<8x32xf32, #tpu.memory_space<vmem>>, vector<8x32xf32>
    tpu.vector_store %arg11[%c0_13, %c0_14], %15 {strides = array<i32>} : memref<8x32xf32, #tpu.memory_space<vmem>>, vector<8x32xf32>,
    %c0_15 = arith.constant 0 : index
    %c0_16 = arith.constant 0 : index
    %17 = vector.load %arg7[%c0_15, %c0_16] : memref<64x64xbf16, #tpu.memory_space<vmem>>, vector<64x64xbf16>
    %cst_17 = arith.constant dense<0.000000e+00> : vector<8x64xf32>
    %18 = tpu.matmul %10, %17, %cst_17 {dimension_numbers = #tpu.dot_dimension_numbers<[1], [0], [0], [1], [0, 0, 1, 1], [], []>} : vector<8x64xbf16>, vector<64x64xbf16>, vector<8x64xf32> -> vector<8x64xf32>
    %c0_18 = arith.constant 0 : index
    %c0_19 = arith.constant 0 : index
    %19 = vector.load %arg8[%c0_18, %c0_19] : memref<1x64xf32, #tpu.memory_space<vmem>>, vector<1x64xf32>
    %20 = vector.broadcast %19 : vector<1x64xf32> to vector<8x64xf32>
    %21 = arith.addf %18, %20 : vector<8x64xf32>
    %cst_20 = arith.constant 0.000000e+00 : f32
    %22 = vector.broadcast %cst_20 : f32 to vector<8x64xf32>
    %23 = arith.maximumf %21, %22 : vector<8x64xf32>
    %24 = arith.truncf %23 : vector<8x64xf32> to vector<8x64xbf16>
    %c0_21 = arith.constant 0 : index
    %c0_22 = arith.constant 0 : index
    %25 = vector.load %arg9[%c0_21, %c0_22] : memref<64x64xbf16, #tpu.memory_space<vmem>>, vector<64x64xbf16>
    %cst_23 = arith.constant dense<0.000000e+00> : vector<8x64xf32>
    %26 = tpu.matmul %24, %25, %cst_23 {dimension_numbers = #tpu.dot_dimension_numbers<[1], [0], [0], [1], [0, 0, 1, 1], [], []>} : vector<8x64xbf16>, vector<64x64xbf16>, vector<8x64xf32> -> vector<8x64xf32>
    %c0_24 = arith.constant 0 : index
    %c0_25 = arith.constant 0 : index
    %27 = vector.load %arg10[%c0_24, %c0_25] : memref<1x64xf32, #tpu.memory_space<vmem>>, vector<1x64xf32>
    %28 = vector.broadcast %27 : vector<1x64xf32> to vector<8x64xf32>
    %29 = arith.addf %26, %28 : vector<8x64xf32>
    %30 = vector.extract_strided_slice %29 {offsets = [0, 0], sizes = [8, 32], strides = [1, 1]} : vector<8x64xf32> to vector<8x32xf32>
    %31 = vector.extract_strided_slice %29 {offsets = [0, 32], sizes = [8, 32], strides = [1, 1]} : vector<8x64xf32> to vector<8x32xf32>
    %cst_26 = arith.constant dense<0xFF800000> : vector<8xf32>
    %32 = vector.multi_reduction <maximumf>, %30, %cst_26 [1] : vector<8x32xf32> to vector<8xf32>
    %33 = vector.shape_cast %32 : vector<8xf32> to vector<8x1xf32>
    %34 = vector.broadcast %33 : vector<8x1xf32> to vector<8x32xf32>
    %35 = arith.subf %30, %34 : vector<8x32xf32>
    %36 = math.exp %35 : vector<8x32xf32>
    %cst_27 = arith.constant dense<0.000000e+00> : vector<8xf32>
    %37 = vector.multi_reduction <add>, %36, %cst_27 [1] : vector<8x32xf32> to vector<8xf32>
    %38 = vector.shape_cast %37 : vector<8xf32> to vector<8x1xf32>
    %39 = tpu.reciprocal %38 : vector<8x1xf32> -> vector<8x1xf32>
    %40 = vector.broadcast %39 : vector<8x1xf32> to vector<8x32xf32>
    %41 = arith.mulf %36, %40 : vector<8x32xf32>
    %c0_28 = arith.constant 0 : index
    %c0_29 = arith.constant 0 : index
    %42 = vector.load %arg12[%c0_28, %c0_29] : memref<8x32xf32, #tpu.memory_space<vmem>>, vector<8x32xf32>
    tpu.vector_store %arg12[%c0_28, %c0_29], %41 {strides = array<i32>} : memref<8x32xf32, #tpu.memory_space<vmem>>, vector<8x32xf32>,
    %c0_30 = arith.constant 0 : index
    %c0_31 = arith.constant 0 : index
    %43 = vector.load %arg2[%c0_30, %c0_31] : memref<8x1xf32, #tpu.memory_space<vmem>>, vector<8x1xf32>
    %44 = math.exp %43 : vector<8x1xf32>
    %45 = vector.broadcast %44 : vector<8x1xf32> to vector<8x32xf32>
    %46 = arith.mulf %45, %41 : vector<8x32xf32>
    %c0_32 = arith.constant 0 : index
    %c0_33 = arith.constant 0 : index
    %47 = vector.load %arg14[%c0_32, %c0_33] : memref<8x32xf32, #tpu.memory_space<vmem>>, vector<8x32xf32>
    tpu.vector_store %arg14[%c0_32, %c0_33], %46 {strides = array<i32>} : memref<8x32xf32, #tpu.memory_space<vmem>>, vector<8x32xf32>,
    %48 = math.exp %31 : vector<8x32xf32>
    %c0_34 = arith.constant 0 : index
    %c0_35 = arith.constant 0 : index
    %49 = vector.load %arg13[%c0_34, %c0_35] : memref<8x32xf32, #tpu.memory_space<vmem>>, vector<8x32xf32>
    tpu.vector_store %arg13[%c0_34, %c0_35], %48 {strides = array<i32>} : memref<8x32xf32, #tpu.memory_space<vmem>>, vector<8x32xf32>,
    return
  }
  func.func @transform_0(%arg0: i32) -> (i32, i32) {
    %c0_i32 = arith.constant 0 : i32
    %c0_i32_0 = arith.constant 0 : i32
    return %arg0, %c0_i32 : i32, i32
  }
  func.func @transform_1(%arg0: i32) -> (i32, i32) {
    %c0_i32 = arith.constant 0 : i32
    %c0_i32_0 = arith.constant 0 : i32
    return %arg0, %c0_i32 : i32, i32
  }
  func.func @transform_2(%arg0: i32) -> (i32, i32) {
    %c0_i32 = arith.constant 0 : i32
    %c0_i32_0 = arith.constant 0 : i32
    %c0_i32_1 = arith.constant 0 : i32
    return %c0_i32, %c0_i32_0 : i32, i32
  }
  func.func @transform_3(%arg0: i32) -> (i32, i32) {
    %c0_i32 = arith.constant 0 : i32
    %c0_i32_0 = arith.constant 0 : i32
    %c0_i32_1 = arith.constant 0 : i32
    return %c0_i32, %c0_i32_0 : i32, i32
  }
  func.func @transform_4(%arg0: i32) -> (i32, i32) {
    %c0_i32 = arith.constant 0 : i32
    %c0_i32_0 = arith.constant 0 : i32
    %c0_i32_1 = arith.constant 0 : i32
    return %c0_i32, %c0_i32_0 : i32, i32
  }
  func.func @transform_5(%arg0: i32) -> (i32, i32) {
    %c0_i32 = arith.constant 0 : i32
    %c0_i32_0 = arith.constant 0 : i32
    %c0_i32_1 = arith.constant 0 : i32
    return %c0_i32, %c0_i32_0 : i32, i32
  }
  func.func @transform_6(%arg0: i32) -> (i32, i32) {
    %c0_i32 = arith.constant 0 : i32
    %c0_i32_0 = arith.constant 0 : i32
    %c0_i32_1 = arith.constant 0 : i32
    return %c0_i32, %c0_i32_0 : i32, i32
  }
  func.func @transform_7(%arg0: i32) -> (i32, i32) {
    %c0_i32 = arith.constant 0 : i32
    %c0_i32_0 = arith.constant 0 : i32
    %c0_i32_1 = arith.constant 0 : i32
    return %c0_i32, %c0_i32_0 : i32, i32
  }
  func.func @transform_8(%arg0: i32) -> (i32, i32) {
    %c0_i32 = arith.constant 0 : i32
    %c0_i32_0 = arith.constant 0 : i32
    %c0_i32_1 = arith.constant 0 : i32
    return %c0_i32, %c0_i32_0 : i32, i32
  }
  func.func @transform_9(%arg0: i32) -> (i32, i32) {
    %c0_i32 = arith.constant 0 : i32
    %c0_i32_0 = arith.constant 0 : i32
    %c0_i32_1 = arith.constant 0 : i32
    return %c0_i32, %c0_i32_0 : i32, i32
  }
  func.func @transform_10(%arg0: i32) -> (i32, i32) {
    %c0_i32 = arith.constant 0 : i32
    %c0_i32_0 = arith.constant 0 : i32
    return %arg0, %c0_i32 : i32, i32
  }
  func.func @transform_11(%arg0: i32) -> (i32, i32) {
    %c0_i32 = arith.constant 0 : i32
    %c0_i32_0 = arith.constant 0 : i32
    return %arg0, %c0_i32 : i32, i32
  }
  func.func @transform_12(%arg0: i32) -> (i32, i32) {
    %c0_i32 = arith.constant 0 : i32
    %c0_i32_0 = arith.constant 0 : i32
    return %arg0, %c0_i32 : i32, i32
  }
  func.func @transform_13(%arg0: i32) -> (i32, i32) {
    %c0_i32 = arith.constant 0 : i32
    %c0_i32_0 = arith.constant 0 : i32
    return %arg0, %c0_i32 : i32, i32
  }
  func.func @transform_14(%arg0: i32) -> (i32, i32) {
    %c0_i32 = arith.constant 0 : i32
    %c0_i32_0 = arith.constant 0 : i32
    return %arg0, %c0_i32 : i32, i32
  }
}

</mosaic_0001>

<llo_original>
// kernel: _lambda_.1
$region0: #{_lambda_.1}
  #allocation0 [shape = 'u32[]', space=smem, size = 0x4, offset = 0x4, fixed_abs, tag = 'smem constant byte address 0x4 - core index']
  #allocation1 [shape = 'u32[144,128]{1,0:T(1,128)}', space=vmem, size = 0x12000, scoped, tag = 'internal scratch']
  %s0 = inlined_call_operand.hbm [shape: f32[8,32], index: 0, kind: input, shape index: {}]
  %s1 = inlined_call_operand.vmem [shape: f32[8,1], index: 1, kind: input, shape index: {}]
  %s2 = inlined_call_operand.vmem [shape: bf16[32,64], index: 2, kind: input, shape index: {}]
  %s3 = inlined_call_operand.vmem [shape: f32[1,64], index: 3, kind: input, shape index: {}, may-alias: {3,7,9}]
  %s4 = inlined_call_operand.hbm [shape: bf16[64,32], index: 4, kind: input, shape index: {}]
  %s5 = inlined_call_operand.vmem [shape: f32[1,32], index: 5, kind: input, shape index: {}]
  %s6 = inlined_call_operand.hbm [shape: bf16[64,64], index: 6, kind: input, shape index: {}]
  %s7 = inlined_call_operand.vmem [shape: f32[1,64], index: 7, kind: input, shape index: {}, may-alias: {3,7,9}]
  %s8 = inlined_call_operand.hbm [shape: bf16[64,64], index: 8, kind: input, shape index: {}]
  %s9 = inlined_call_operand.vmem [shape: f32[1,64], index: 9, kind: input, shape index: {}, may-alias: {3,7,9}]
  %s10 = inlined_call_operand.vmem [shape: f32[8,32], index: 10, kind: output, shape index: {0}]
  %s11 = inlined_call_operand.hbm [shape: f32[8,32], index: 11, kind: output, shape index: {1}]
  %s12 = inlined_call_operand.hbm [shape: f32[8,32], index: 12, kind: output, shape index: {2}]
  %s13 = inlined_call_operand.hbm [shape: f32[8,32], index: 13, kind: output, shape index: {3}]
  %s14 = inlined_call_operand.hbm [shape: f32[8,64], index: 14, kind: output, shape index: {4}]
  %15 = xla_tuple %s10, %s11, %s12, %s13, %s14
  %s16 = sld [smem:[#allocation0]]
  $region98: #{_lambda_.1} parent=0
    _
  %s18 = ssub.s32 1, %s16
  %s19 = scalar_select 0, %s18, %s16
  $region1: #{_lambda_.1} parent=0
    #allocation2 [shape = 'u8[4096]{0}', space=vmem, size = 0x1000, scoped, tag = 'input window, operand 0, single buffered']
    #allocation3 [shape = 's32[1]{0}', space=sflag, size = 0x4, scoped, tag = 'scoped memory for _lambda_.1']
    #allocation4 [shape = 's32[1]{0}', space=sflag, size = 0x4, scoped, tag = 'scoped memory for _lambda_.1']
    #allocation5 [shape = 'u8[16384]{0}', space=vmem, size = 0x4000, scoped, tag = 'input window, operand 4, single buffered']
    #allocation6 [shape = 's32[1]{0}', space=sflag, size = 0x4, scoped, tag = 'scoped memory for _lambda_.1']
    #allocation7 [shape = 'u8[16384]{0}', space=vmem, size = 0x4000, scoped, tag = 'input window, operand 6, single buffered']
    #allocation8 [shape = 'u8[16384]{0}', space=vmem, size = 0x4000, scoped, tag = 'input window, operand 8, single buffered']
    #allocation9 [shape = 's32[1]{0}', space=sflag, size = 0x4, scoped, tag = 'scoped memory for _lambda_.1']
    #allocation10 [shape = 'u8[4096]{0}', space=vmem, size = 0x1000, scoped, tag = 'output window, operand 1, single buffered']
    #allocation11 [shape = 'u8[4096]{0}', space=vmem, size = 0x1000, scoped, tag = 'output window, operand 2, single buffered']
    #allocation12 [shape = 's32[1]{0}', space=sflag, size = 0x4, scoped, tag = 'scoped memory for _lambda_.1']
    #allocation13 [shape = 'u8[4096]{0}', space=vmem, size = 0x1000, scoped, tag = 'output window, operand 3, single buffered']
    #allocation14 [shape = 'u8[4096]{0}', space=vmem, size = 0x1000, scoped, tag = 'output window, operand 4, single buffered']
    #allocation15 [shape = 's32[1]{0}', space=sflag, size = 0x4, scoped, tag = 'scoped memory for _lambda_.1']
    %20 = vsyncpa [#allocation3], 0
    %21 = vsyncpa [#allocation6], 0
    %22 = vsyncpa [#allocation9], 0
    %23 = vsyncpa [#allocation4], 0
    %24 = vsyncpa [#allocation12], 0
    %25 = vsyncpa [#allocation15], 0
    // Predicated region
    $region2: #{_lambda_.1} parent=1 // pred_check
      _
    $region3: #{_lambda_.1} parent=1 // pred_check_branch
      %27 = sbr.rel (0) target = $region5
    $region4: #{_lambda_.1} parent=1 // pred_region
      %s29 = ssub.s32 128, 128
      %30 = vsyncadd [#allocation3], %s29
      %s32 = sshll.u32 [#allocation2], 4
      %s33 = int_to_ptr.vmem [resolvable:$true] %s32
      %35 = dma.hbm_to_vmem [thread:$0]  %s0, 128, %s33, [#allocation3]
    $region5: #{_lambda_.1} parent=1 // pred_fallthru
      _
    // Predicated region
    $region6: #{_lambda_.1} parent=1 // pred_check
      _
    $region7: #{_lambda_.1} parent=1 // pred_check_branch
      %37 = sbr.rel (0) target = $region9
    $region8: #{_lambda_.1} parent=1 // pred_region
      _
    $region9: #{_lambda_.1} parent=1 // pred_fallthru
      _
    // Predicated region
    $region10: #{_lambda_.1} parent=1 // pred_check
      _
    $region11: #{_lambda_.1} parent=1 // pred_check_branch
      %39 = sbr.rel (0) target = $region13
    $region12: #{_lambda_.1} parent=1 // pred_region
      _
    $region13: #{_lambda_.1} parent=1 // pred_fallthru
      _
    // Predicated region
    $region14: #{_lambda_.1} parent=1 // pred_check
      _
    $region15: #{_lambda_.1} parent=1 // pred_check_branch
      %41 = sbr.rel (0) target = $region17
    $region16: #{_lambda_.1} parent=1 // pred_region
      _
    $region17: #{_lambda_.1} parent=1 // pred_fallthru
      _
    // Predicated region
    $region18: #{_lambda_.1} parent=1 // pred_check
      _
    $region19: #{_lambda_.1} parent=1 // pred_check_branch
      %43 = sbr.rel (0) target = $region21
    $region20: #{_lambda_.1} parent=1 // pred_region
      %s45 = ssub.s32 512, 512
      %46 = vsyncadd [#allocation6], %s45
      %s47 = sshll.u32 [#allocation5], 4
      %s48 = int_to_ptr.vmem [resolvable:$true] %s47
      %53 = dma.hbm_to_vmem [thread:$0]  %s4, 512, %s48, [#allocation6], 64, 64, 4
    $region21: #{_lambda_.1} parent=1 // pred_fallthru
      _
    // Predicated region
    $region22: #{_lambda_.1} parent=1 // pred_check
      _
    $region23: #{_lambda_.1} parent=1 // pred_check_branch
      %55 = sbr.rel (0) target = $region25
    $region24: #{_lambda_.1} parent=1 // pred_region
      _
    $region25: #{_lambda_.1} parent=1 // pred_fallthru
      _
    // Predicated region
    $region26: #{_lambda_.1} parent=1 // pred_check
      _
    $region27: #{_lambda_.1} parent=1 // pred_check_branch
      %57 = sbr.rel (0) target = $region29
    $region28: #{_lambda_.1} parent=1 // pred_region
      %s59 = ssub.s32 512, 512
      %60 = vsyncadd [#allocation6], %s59
      %s61 = sshll.u32 [#allocation7], 4
      %s62 = int_to_ptr.vmem [resolvable:$true] %s61
      %67 = dma.hbm_to_vmem [thread:$0]  %s6, 512, %s62, [#allocation6], 64, 64, 4
    $region29: #{_lambda_.1} parent=1 // pred_fallthru
      _
    // Predicated region
    $region30: #{_lambda_.1} parent=1 // pred_check
      _
    $region31: #{_lambda_.1} parent=1 // pred_check_branch
      %69 = sbr.rel (0) target = $region33
    $region32: #{_lambda_.1} parent=1 // pred_region
      _
    $region33: #{_lambda_.1} parent=1 // pred_fallthru
      _
    // Predicated region
    $region34: #{_lambda_.1} parent=1 // pred_check
      _
    $region35: #{_lambda_.1} parent=1 // pred_check_branch
      %71 = sbr.rel (0) target = $region37
    $region36: #{_lambda_.1} parent=1 // pred_region
      %s73 = ssub.s32 512, 512
      %74 = vsyncadd [#allocation9], %s73
      %s75 = sshll.u32 [#allocation8], 4
      %s76 = int_to_ptr.vmem [resolvable:$true] %s75
      %81 = dma.hbm_to_vmem [thread:$0]  %s8, 512, %s76, [#allocation9], 64, 64, 4
    $region37: #{_lambda_.1} parent=1 // pred_fallthru
      _
    // Predicated region
    $region38: #{_lambda_.1} parent=1 // pred_check
      _
    $region39: #{_lambda_.1} parent=1 // pred_check_branch
      %83 = sbr.rel (0) target = $region41
    $region40: #{_lambda_.1} parent=1 // pred_region
      _
    $region41: #{_lambda_.1} parent=1 // pred_fallthru
      _
    // Predicated region
    $region42: #{_lambda_.1} parent=1 // pred_check
      _
    $region43: #{_lambda_.1} parent=1 // pred_check_branch
      %85 = sbr.rel (0) target = $region45
    $region44: #{_lambda_.1} parent=1 // pred_region
      %86 = dma.done [#allocation3], 128
    $region45: #{_lambda_.1} parent=1 // pred_fallthru
      _
    // Predicated region
    $region46: #{_lambda_.1} parent=1 // pred_check
      _
    $region47: #{_lambda_.1} parent=1 // pred_check_branch
      %88 = sbr.rel (0) target = $region49
    $region48: #{_lambda_.1} parent=1 // pred_region
      %89 = dma.done [#allocation6], 512
    $region49: #{_lambda_.1} parent=1 // pred_fallthru
      _
    // Predicated region
    $region50: #{_lambda_.1} parent=1 // pred_check
      _
    $region51: #{_lambda_.1} parent=1 // pred_check_branch
      %91 = sbr.rel (0) target = $region53
    $region52: #{_lambda_.1} parent=1 // pred_region
      %92 = dma.done [#allocation6], 512
    $region53: #{_lambda_.1} parent=1 // pred_fallthru
      _
    // Predicated region
    $region54: #{_lambda_.1} parent=1 // pred_check
      _
    $region55: #{_lambda_.1} parent=1 // pred_check_branch
      %94 = sbr.rel (0) target = $region57
    $region56: #{_lambda_.1} parent=1 // pred_region
      %95 = dma.done [#allocation9], 512
    $region57: #{_lambda_.1} parent=1 // pred_fallthru
      _
    %v97 = vld [vmem:[#allocation2] sm:$0xff]
    %v98 = vpack.c.bf16 %v97, %v97
    %v99 = vld [vmem:[%s2] sm:$0xf]
    %v100 = vld [vmem:[%s2 + $0x4] sm:$0xf]
    %v101 = vld [vmem:[%s2 + $0x8] sm:$0xf]
    %v102 = vld [vmem:[%s2 + $0xc] sm:$0xf]
    %v103 = vld [vmem:[%s3] sm:$0x1]
    %v105 = vlaneseq
    %v106 = vshrl.u32 %v105, 7
    %v107 = vsub.s32 0, %v106
    %v108 = vrot.slane %v103, %v107
    %v114 = vunpack.c.l.b16 %v99
    %v115 = vunpack.c.l.b16 %v100
    %v116 = vunpack.c.l.b16 %v101
    %v117 = vunpack.c.l.b16 %v102
    %v118 = vpack.c.b16 %v115, %v114
    %v119 = vpack.c.b16 %v117, %v116
    %vm122 = vcmask 261120
    %v124 = vsel %vm122, %v98, 0
    %126 = vmatprep.subr.bf16.mxu0 0
    %127 = vmatpush1.bf16.msra.mxu0 0
    %128 = vmatprep.subr.bf16.mxu0 0
    %129 = vmatpush1.bf16.msra.mxu0 0
    %130 = vmatprep.subr.bf16.mxu0 0
    %131 = vmatpush1.bf16.msra.mxu0 0
    %132 = vmatprep.subr.bf16.mxu0 0
    %133 = vmatpush1.bf16.msra.mxu0 0
    %134 = vmatprep.subr.bf16.mxu0 0
    %135 = vmatpush1.bf16.msra.mxu0 0
    %136 = vmatprep.subr.bf16.mxu0 0
    %137 = vmatpush1.bf16.msra.mxu0 0
    %138 = vmatprep.subr.bf16.mxu0 0
    %139 = vmatpush1.bf16.msra.mxu0 %v119
    %140 = vmatprep.subr.bf16.mxu0 0
    %141 = vmatpush1.bf16.msra.mxu0 %v118
    %142 = vmatprep.subr.bf16.mxu0 0
    %143 = vmatpush2.bf16.msra.mxu0 0
    %144 = vmatprep.subr.bf16.mxu0 0
    %145 = vmatpush2.bf16.msra.mxu0 0
    %146 = vmatprep.subr.bf16.mxu0 0
    %147 = vmatpush2.bf16.msra.mxu0 0
    %148 = vmatprep.subr.bf16.mxu0 0
    %149 = vmatpush2.bf16.msra.mxu0 0
    %150 = vmatprep.subr.bf16.mxu0 0
    %151 = vmatpush2.bf16.msra.mxu0 0
    %152 = vmatprep.subr.bf16.mxu0 0
    %153 = vmatpush2.bf16.msra.mxu0 0
    %154 = vmatprep.subr.bf16.mxu0 0
    %155 = vmatpush2.bf16.msra.mxu0 0
    %156 = vmatprep.subr.bf16.mxu0 0
    %157 = vmatpush2.bf16.msra.mxu0 0
    %158 = vmatprep.mubr.bf16.mxu0 0
    %159 = vmatmul.mubr.bf16.gmra.mxu0 %v124
    %v160 = vpop.f32.mrf.mxu0
    %v161 = vadd.f32 %v108, %v160
    %v162 = vpop.f32.mrf.mxu0
    %v163 = vpop.f32.mrf.mxu0
    %v164 = vpop.f32.mrf.mxu0
    %165 = vdwg.mxu0
    %v166 = vmax.f32 %v161, 0.0
    %vm167 = vcmask 523264
    %168 = vst.msk [vmem:[#allocation14] sm:$0xff] %vm167, %v166
    %v169 = vpack.c.bf16 %v166, %v166
    %v170 = vld [vmem:[#allocation5] sm:$0xf]
    %v171 = vld [vmem:[#allocation5 + $0x4] sm:$0xf]
    %v172 = vld [vmem:[#allocation5 + $0x8] sm:$0xf]
    %v173 = vld [vmem:[#allocation5 + $0xc] sm:$0xf]
    %v174 = vld [vmem:[#allocation5 + $0x10] sm:$0xf]
    %v175 = vld [vmem:[#allocation5 + $0x14] sm:$0xf]
    %v176 = vld [vmem:[#allocation5 + $0x18] sm:$0xf]
    %v177 = vld [vmem:[#allocation5 + $0x1c] sm:$0xf]
    %v178 = vld [vmem:[%s5] sm:$0x1]
    %v180 = vlaneseq
    %v181 = vshrl.u32 %v180, 7
    %v182 = vsub.s32 0, %v181
    %v183 = vrot.slane %v178, %v182
    %v193 = vunpack.c.l.b16 %v170
    %v194 = vunpack.c.l.b16 %v171
    %v195 = vunpack.c.l.b16 %v172
    %v196 = vunpack.c.l.b16 %v173
    %v197 = vunpack.c.l.b16 %v174
    %v198 = vunpack.c.l.b16 %v175
    %v199 = vunpack.c.l.b16 %v176
    %v200 = vunpack.c.l.b16 %v177
    %v201 = vpack.c.b16 %v194, %v193
    %v202 = vpack.c.b16 %v196, %v195
    %v203 = vpack.c.b16 %v198, %v197
    %v204 = vpack.c.b16 %v200, %v199
    %v210 = vsel %vm167, %v169, 0
    %212 = vmatprep.subr.bf16.mxu0 0
    %213 = vmatpush1.bf16.msra.mxu0 0
    %214 = vmatprep.subr.bf16.mxu0 0
    %215 = vmatpush1.bf16.msra.mxu0 0
    %216 = vmatprep.subr.bf16.mxu0 0
    %217 = vmatpush1.bf16.msra.mxu0 0
    %218 = vmatprep.subr.bf16.mxu0 0
    %219 = vmatpush1.bf16.msra.mxu0 0
    %220 = vmatprep.subr.bf16.mxu0 0
    %221 = vmatpush1.bf16.msra.mxu0 %v204
    %222 = vmatprep.subr.bf16.mxu0 0
    %223 = vmatpush1.bf16.msra.mxu0 %v203
    %224 = vmatprep.subr.bf16.mxu0 0
    %225 = vmatpush1.bf16.msra.mxu0 %v202
    %226 = vmatprep.subr.bf16.mxu0 0
    %227 = vmatpush1.bf16.msra.mxu0 %v201
    %228 = vmatprep.subr.bf16.mxu0 0
    %229 = vmatpush2.bf16.msra.mxu0 0
    %230 = vmatprep.subr.bf16.mxu0 0
    %231 = vmatpush2.bf16.msra.mxu0 0
    %232 = vmatprep.subr.bf16.mxu0 0
    %233 = vmatpush2.bf16.msra.mxu0 0
    %234 = vmatprep.subr.bf16.mxu0 0
    %235 = vmatpush2.bf16.msra.mxu0 0
    %236 = vmatprep.subr.bf16.mxu0 0
    %237 = vmatpush2.bf16.msra.mxu0 0
    %238 = vmatprep.subr.bf16.mxu0 0
    %239 = vmatpush2.bf16.msra.mxu0 0
    %240 = vmatprep.subr.bf16.mxu0 0
    %241 = vmatpush2.bf16.msra.mxu0 0
    %242 = vmatprep.subr.bf16.mxu0 0
    %243 = vmatpush2.bf16.msra.mxu0 0
    %244 = vmatprep.mubr.bf16.mxu0 0
    %245 = vmatmul.mubr.bf16.gmra.mxu0 %v210
    %v246 = vpop.f32.mrf.mxu0
    %v247 = vadd.f32 %v183, %v246
    %v248 = vpop.f32.mrf.mxu0
    %v249 = vpop.f32.mrf.mxu0
    %v250 = vpop.f32.mrf.mxu0
    %251 = vdwg.mxu0
    %252 = vst.msk [vmem:[%s10] sm:$0xff] %vm122, %v247
    %v253 = vld [vmem:[#allocation7] sm:$0xf]
    %v254 = vld [vmem:[#allocation7 + $0x4] sm:$0xf]
    %v255 = vld [vmem:[#allocation7 + $0x8] sm:$0xf]
    %v256 = vld [vmem:[#allocation7 + $0xc] sm:$0xf]
    %v257 = vld [vmem:[#allocation7 + $0x10] sm:$0xf]
    %v258 = vld [vmem:[#allocation7 + $0x14] sm:$0xf]
    %v259 = vld [vmem:[#allocation7 + $0x18] sm:$0xf]
    %v260 = vld [vmem:[#allocation7 + $0x1c] sm:$0xf]
    %v261 = vld [vmem:[%s7] sm:$0x1]
    %v263 = vlaneseq
    %v264 = vshrl.u32 %v263, 7
    %v265 = vsub.s32 0, %v264
    %v266 = vrot.slane %v261, %v265
    %v276 = vunpack.c.l.b16 %v253
    %v277 = vunpack.c.l.b16 %v254
    %v278 = vunpack.c.l.b16 %v255
    %v279 = vunpack.c.l.b16 %v256
    %v280 = vunpack.c.l.b16 %v257
    %v281 = vunpack.c.l.b16 %v258
    %v282 = vunpack.c.l.b16 %v259
    %v283 = vunpack.c.l.b16 %v260
    %v284 = vpack.c.b16 %v277, %v276
    %v285 = vpack.c.b16 %v279, %v278
    %v286 = vpack.c.b16 %v281, %v280
    %v287 = vpack.c.b16 %v283, %v282
    %292 = vmatprep.subr.bf16.mxu0 0
    %293 = vmatpush1.bf16.msra.mxu0 0
    %294 = vmatprep.subr.bf16.mxu0 0
    %295 = vmatpush1.bf16.msra.mxu0 0
    %296 = vmatprep.subr.bf16.mxu0 0
    %297 = vmatpush1.bf16.msra.mxu0 0
    %298 = vmatprep.subr.bf16.mxu0 0
    %299 = vmatpush1.bf16.msra.mxu0 0
    %300 = vmatprep.subr.bf16.mxu0 0
    %301 = vmatpush1.bf16.msra.mxu0 %v287
    %302 = vmatprep.subr.bf16.mxu0 0
    %303 = vmatpush1.bf16.msra.mxu0 %v286
    %304 = vmatprep.subr.bf16.mxu0 0
    %305 = vmatpush1.bf16.msra.mxu0 %v285
    %306 = vmatprep.subr.bf16.mxu0 0
    %307 = vmatpush1.bf16.msra.mxu0 %v284
    %308 = vmatprep.subr.bf16.mxu0 0
    %309 = vmatpush2.bf16.msra.mxu0 0
    %310 = vmatprep.subr.bf16.mxu0 0
    %311 = vmatpush2.bf16.msra.mxu0 0
    %312 = vmatprep.subr.bf16.mxu0 0
    %313 = vmatpush2.bf16.msra.mxu0 0
    %314 = vmatprep.subr.bf16.mxu0 0
    %315 = vmatpush2.bf16.msra.mxu0 0
    %316 = vmatprep.subr.bf16.mxu0 0
    %317 = vmatpush2.bf16.msra.mxu0 0
    %318 = vmatprep.subr.bf16.mxu0 0
    %319 = vmatpush2.bf16.msra.mxu0 0
    %320 = vmatprep.subr.bf16.mxu0 0
    %321 = vmatpush2.bf16.msra.mxu0 0
    %322 = vmatprep.subr.bf16.mxu0 0
    %323 = vmatpush2.bf16.msra.mxu0 0
    %324 = vmatprep.mubr.bf16.mxu0 0
    %325 = vmatmul.mubr.bf16.gmra.mxu0 %v210
    %v326 = vpop.f32.mrf.mxu0
    %v327 = vadd.f32 %v266, %v326
    %v328 = vpop.f32.mrf.mxu0
    %v329 = vpop.f32.mrf.mxu0
    %v330 = vpop.f32.mrf.mxu0
    %331 = vdwg.mxu0
    %v332 = vmax.f32 %v327, 0.0
    %v333 = vpack.c.bf16 %v332, %v332
    %v334 = vld [vmem:[#allocation8] sm:$0xf]
    %v335 = vld [vmem:[#allocation8 + $0x4] sm:$0xf]
    %v336 = vld [vmem:[#allocation8 + $0x8] sm:$0xf]
    %v337 = vld [vmem:[#allocation8 + $0xc] sm:$0xf]
    %v338 = vld [vmem:[#allocation8 + $0x10] sm:$0xf]
    %v339 = vld [vmem:[#allocation8 + $0x14] sm:$0xf]
    %v340 = vld [vmem:[#allocation8 + $0x18] sm:$0xf]
    %v341 = vld [vmem:[#allocation8 + $0x1c] sm:$0xf]
    %v342 = vld [vmem:[%s9] sm:$0x1]
    %v344 = vlaneseq
    %v345 = vshrl.u32 %v344, 7
    %v346 = vsub.s32 0, %v345
    %v347 = vrot.slane %v342, %v346
    %v357 = vunpack.c.l.b16 %v334
    %v358 = vunpack.c.l.b16 %v335
    %v359 = vunpack.c.l.b16 %v336
    %v360 = vunpack.c.l.b16 %v337
    %v361 = vunpack.c.l.b16 %v338
    %v362 = vunpack.c.l.b16 %v339
    %v363 = vunpack.c.l.b16 %v340
    %v364 = vunpack.c.l.b16 %v341
    %v365 = vpack.c.b16 %v358, %v357
    %v366 = vpack.c.b16 %v360, %v359
    %v367 = vpack.c.b16 %v362, %v361
    %v368 = vpack.c.b16 %v364, %v363
    %v374 = vsel %vm167, %v333, 0
    %376 = vmatprep.subr.bf16.mxu0 0
    %377 = vmatpush1.bf16.msra.mxu0 0
    %378 = vmatprep.subr.bf16.mxu0 0
    %379 = vmatpush1.bf16.msra.mxu0 0
    %380 = vmatprep.subr.bf16.mxu0 0
    %381 = vmatpush1.bf16.msra.mxu0 0
    %382 = vmatprep.subr.bf16.mxu0 0
    %383 = vmatpush1.bf16.msra.mxu0 0
    %384 = vmatprep.subr.bf16.mxu0 0
    %385 = vmatpush1.bf16.msra.mxu0 %v368
    %386 = vmatprep.subr.bf16.mxu0 0
    %387 = vmatpush1.bf16.msra.mxu0 %v367
    %388 = vmatprep.subr.bf16.mxu0 0
    %389 = vmatpush1.bf16.msra.mxu0 %v366
    %390 = vmatprep.subr.bf16.mxu0 0
    %391 = vmatpush1.bf16.msra.mxu0 %v365
    %392 = vmatprep.subr.bf16.mxu0 0
    %393 = vmatpush2.bf16.msra.mxu0 0
    %394 = vmatprep.subr.bf16.mxu0 0
    %395 = vmatpush2.bf16.msra.mxu0 0
    %396 = vmatprep.subr.bf16.mxu0 0
    %397 = vmatpush2.bf16.msra.mxu0 0
    %398 = vmatprep.subr.bf16.mxu0 0
    %399 = vmatpush2.bf16.msra.mxu0 0
    %400 = vmatprep.subr.bf16.mxu0 0
    %401 = vmatpush2.bf16.msra.mxu0 0
    %402 = vmatprep.subr.bf16.mxu0 0
    %403 = vmatpush2.bf16.msra.mxu0 0
    %404 = vmatprep.subr.bf16.mxu0 0
    %405 = vmatpush2.bf16.msra.mxu0 0
    %406 = vmatprep.subr.bf16.mxu0 0
    %407 = vmatpush2.bf16.msra.mxu0 0
    %408 = vmatprep.mubr.bf16.mxu0 0
    %409 = vmatmul.mubr.bf16.gmra.mxu0 %v374
    %v410 = vpop.f32.mrf.mxu0
    %v411 = vadd.f32 %v347, %v410
    %v412 = vpop.f32.mrf.mxu0
    %v413 = vpop.f32.mrf.mxu0
    %v414 = vpop.f32.mrf.mxu0
    %415 = vdwg.mxu0
    %v416 = vsel %vm122, %v411, -inf
    %417 = vmax.xlane.f32.xlu0 %v416
    %v418 = vpop.xlane.xlu0 %417
    %v419 = vsub.f32 %v411, %v418
    %v420 = vmul.f32 %v419, 1.442695
    %v421 = vpow.pop %v420
    %v422 = vsel %vm122, %v421, 0.0
    %423 = vadd.xlane.f32.xlu0 %v422
    %v424 = vpop.xlane.xlu0 %423
    %v425 = vrcp.pop %v424
    %v426 = vmul.f32 %v421, %v425
    %427 = vst.msk [vmem:[#allocation10] sm:$0xff] %vm122, %v426
    %v428 = vld [vmem:[%s1] sm:$0xff]
    %v429 = vmul.f32 %v428, 1.442695
    %v430 = vpow.pop %v429
    %432 = vset.pattern.permute.xlu0 0
    %433 = vperm.xlu0 %432, %v430
    %v434 = vpop.permute.xlu0 %433
    %v436 = vmul.f32 %v434, %v426
    %437 = vst.msk [vmem:[#allocation13] sm:$0xff] %vm122, %v436
    %v438 = vmul.f32 %v411, 1.442695
    %v439 = vpow.pop %v438
    %441 = vrot.lane.b32.xlu0 %v439, 96
    %v442 = vpop.permute.xlu0 %441
    %444 = vst.msk [vmem:[#allocation11] sm:$0xff] %vm122, %v442
    // Predicated region
    $region58: #{_lambda_.1} parent=1 // pred_check
      _
    $region59: #{_lambda_.1} parent=1 // pred_check_branch
      %446 = sbr.rel (0) target = $region61
    $region60: #{_lambda_.1} parent=1 // pred_region
      _
    $region61: #{_lambda_.1} parent=1 // pred_fallthru
      _
    // Predicated region
    $region62: #{_lambda_.1} parent=1 // pred_check
      _
    $region63: #{_lambda_.1} parent=1 // pred_check_branch
      %448 = sbr.rel (0) target = $region65
    $region64: #{_lambda_.1} parent=1 // pred_region
      %s450 = ssub.s32 128, 128
      %451 = vsyncadd [#allocation4], %s450
      %s453 = sshll.u32 [#allocation10], 4
      %s454 = int_to_ptr.vmem [resolvable:$true] %s453
      %456 = dma.vmem_to_hbm [thread:$0]  %s454, 128, %s11, [#allocation4]
    $region65: #{_lambda_.1} parent=1 // pred_fallthru
      _
    // Predicated region
    $region66: #{_lambda_.1} parent=1 // pred_check
      _
    $region67: #{_lambda_.1} parent=1 // pred_check_branch
      %458 = sbr.rel (0) target = $region69
    $region68: #{_lambda_.1} parent=1 // pred_region
      %s460 = ssub.s32 128, 128
      %461 = vsyncadd [#allocation12], %s460
      %s463 = sshll.u32 [#allocation11], 4
      %s464 = int_to_ptr.vmem [resolvable:$true] %s463
      %466 = dma.vmem_to_hbm [thread:$0]  %s464, 128, %s12, [#allocation12]
    $region69: #{_lambda_.1} parent=1 // pred_fallthru
      _
    // Predicated region
    $region70: #{_lambda_.1} parent=1 // pred_check
      _
    $region71: #{_lambda_.1} parent=1 // pred_check_branch
      %468 = sbr.rel (0) target = $region73
    $region72: #{_lambda_.1} parent=1 // pred_region
      %s470 = ssub.s32 128, 128
      %471 = vsyncadd [#allocation12], %s470
      %s473 = sshll.u32 [#allocation13], 4
      %s474 = int_to_ptr.vmem [resolvable:$true] %s473
      %476 = dma.vmem_to_hbm [thread:$0]  %s474, 128, %s13, [#allocation12]
    $region73: #{_lambda_.1} parent=1 // pred_fallthru
      _
    // Predicated region
    $region74: #{_lambda_.1} parent=1 // pred_check
      _
    $region75: #{_lambda_.1} parent=1 // pred_check_branch
      %478 = sbr.rel (0) target = $region77
    $region76: #{_lambda_.1} parent=1 // pred_region
      %s480 = ssub.s32 128, 128
      %481 = vsyncadd [#allocation15], %s480
      %s483 = sshll.u32 [#allocation14], 4
      %s484 = int_to_ptr.vmem [resolvable:$true] %s483
      %486 = dma.vmem_to_hbm [thread:$0]  %s484, 128, %s14, [#allocation15]
    $region77: #{_lambda_.1} parent=1 // pred_fallthru
      _
    // Predicated region
    $region78: #{_lambda_.1} parent=1 // pred_check
      _
    $region79: #{_lambda_.1} parent=1 // pred_check_branch
      %488 = sbr.rel (0) target = $region81
    $region80: #{_lambda_.1} parent=1 // pred_region
      _
    $region81: #{_lambda_.1} parent=1 // pred_fallthru
      _
    // Predicated region
    $region82: #{_lambda_.1} parent=1 // pred_check
      _
    $region83: #{_lambda_.1} parent=1 // pred_check_branch
      %490 = sbr.rel (0) target = $region85
    $region84: #{_lambda_.1} parent=1 // pred_region
      %491 = dma.done [#allocation4], 128
    $region85: #{_lambda_.1} parent=1 // pred_fallthru
      _
    // Predicated region
    $region86: #{_lambda_.1} parent=1 // pred_check
      _
    $region87: #{_lambda_.1} parent=1 // pred_check_branch
      %493 = sbr.rel (0) target = $region89
    $region88: #{_lambda_.1} parent=1 // pred_region
      %494 = dma.done [#allocation12], 128
    $region89: #{_lambda_.1} parent=1 // pred_fallthru
      _
    // Predicated region
    $region90: #{_lambda_.1} parent=1 // pred_check
      _
    $region91: #{_lambda_.1} parent=1 // pred_check_branch
      %496 = sbr.rel (0) target = $region93
    $region92: #{_lambda_.1} parent=1 // pred_region
      %497 = dma.done [#allocation12], 128
    $region93: #{_lambda_.1} parent=1 // pred_fallthru
      _
    // Predicated region
    $region94: #{_lambda_.1} parent=1 // pred_check
      _
    $region95: #{_lambda_.1} parent=1 // pred_check_branch
      %499 = sbr.rel (0) target = $region97
    $region96: #{_lambda_.1} parent=1 // pred_region
      %500 = dma.done [#allocation15], 128
    $region97: #{_lambda_.1} parent=1 // pred_fallthru
      _
    %501 = vsyncpa [#allocation3], 1
    %502 = vsyncpa [#allocation6], 1
    %503 = vsyncpa [#allocation9], 1
    %504 = vsyncpa [#allocation4], 1
    %505 = vsyncpa [#allocation12], 1
    %506 = vsyncpa [#allocation15], 1

</llo_original>
